<compile_context>
chip_gen: v6e
topology: v6e:2x2x1
jax: 0.10.0
libtpu: 0.0.40
codegen_flags: <defaults>
</compile_context>

<pallas_src>
import jax
import jax.numpy as jnp
from jax.experimental import pallas as pl
from jax.experimental.pallas import tpu as pltpu


# ---------------------------------------------------------------------------
# Fused kernel: full ConvEncoder forward, all batches in one lane-packed slab.
# ---------------------------------------------------------------------------
def _conv_encoder_kernel(x_ref, w1_ref, b1_ref, w2_ref, b2_ref, w3_ref, b3_ref,
                         w4_ref, b4_ref, wmu_ref, bmu_ref, wlv_ref, blv_ref,
                         mask_ref, mu_ref, lv_ref, s_ref):
    """Refs (all whole-array, VMEM resident; gridless call):
      x_ref   : (B, C, T)       input
      wN_ref  : (C, K*C)        tap-fused weights of conv layer N (tap-major blocks)
      bN_ref  : (C, 1)          bias of conv layer N
      wmu/wlv : (Z, C)          1x1 head weights,  bmu/blv : (Z, 1)
      mask_ref: (1, W)          1.0 on data columns, 0.0 on zero-boundary columns
      mu_ref  : (Z, B*To)       lane-dense packed mu      (To = T-2)
      lv_ref  : (Z, B*To)       lane-dense packed log_var
      s_ref   : (C, W) scratch  zero-padded batch-lane slab, W = B*(T+2);
                                segment b's data lives in columns
                                [b*(T+2)+1, b*(T+2)+1+T), its boundaries are zero.
    """
    f32 = jnp.float32
    B, C, T = x_ref.shape
    seg = T + 2
    W = B * seg
    To = T - 2
    mask = mask_ref[...]                                   # (1, W)

    # ---- pack x into the slab:  [0 | x_b (T cols) | 0] per batch segment.
    # Zeroed once; later writes never touch the boundary columns (masked writes
    # keep them zero), so the 'same'-conv padding invariant holds for free.
    s_ref[...] = jnp.zeros_like(s_ref)
    for b in range(B):                                     # static unroll; B is small
        s_ref[:, b * seg + 1: b * seg + 1 + T] = x_ref[b]

    # ---- conv1: k=2, torch 'same' pads (0,1):  y[t] = W0 x[t] + W1 x[t+1]
    # One fused matmul: operand = [tap0 view ; tap1 view] stacked on sublanes.
    s = s_ref[...]
    op = jnp.concatenate([s[:, 0:W - 1], s[:, 1:W]], axis=0)           # (2C, W-1)
    h = jnp.dot(w1_ref[...], op, preferred_element_type=f32) + b1_ref[...]
    s_ref[:, 0:W - 1] = h * mask[:, 0:W - 1]      # column W-1 stays zero (boundary)

    # ---- conv2: k=3, pads (1,1):  y[t] = W0 h[t-1] + W1 h[t] + W2 h[t+1]
    s = s_ref[...]
    op = jnp.concatenate([s[:, 0:W - 2], s[:, 1:W - 1], s[:, 2:W]], axis=0)  # (3C, W-2)
    h = jnp.dot(w2_ref[...], op, preferred_element_type=f32) + b2_ref[...]
    s_ref[:, 1:W - 1] = h * mask[:, 1:W - 1]      # columns 0 and W-1 stay zero

    # ---- conv3: k=3, pads (1,1).  conv4's VALID window never reads conv3's
    # boundary columns, so no mask and no slab writeback are needed here.
    s = s_ref[...]
    op = jnp.concatenate([s[:, 0:W - 2], s[:, 1:W - 1], s[:, 2:W]], axis=0)
    h3 = jnp.dot(w3_ref[...], op, preferred_element_type=f32) + b3_ref[...]  # (C, W-2); col k == slab col k+1

    # ---- conv4: k=3, valid (length T-2).  Computed over the full packed width;
    # batch b's valid output occupies columns [b*seg, b*seg+To) of h4.
    op = jnp.concatenate([h3[:, 0:W - 4], h3[:, 1:W - 3], h3[:, 2:W - 2]], axis=0)  # (3C, W-4)
    h4 = jnp.dot(w4_ref[...], op, preferred_element_type=f32) + b4_ref[...]         # (C, W-4)

    # ---- 1x1 heads, written straight to their own lane-dense packed outputs.
    mu = jnp.dot(wmu_ref[...], h4, preferred_element_type=f32) + bmu_ref[...]        # (Z, W-4)
    lv = jnp.dot(wlv_ref[...], h4, preferred_element_type=f32) + blv_ref[...]
    for b in range(B):                                     # compact valid columns
        src = slice(b * seg, b * seg + To)
        dst = slice(b * To, (b + 1) * To)
        mu_ref[:, dst] = mu[:, src].astype(mu_ref.dtype)
        lv_ref[:, dst] = lv[:, src].astype(lv_ref.dtype)


# ---------------------------------------------------------------------------
# Wrapper
# ---------------------------------------------------------------------------
@jax.jit
def conv_encoder_forward(kp, x):
    """x: (B, dim_x, T) float32 -> (mu, log_var), each (B, dim_z, T-2)."""
    B, C, T = x.shape
    Z = kp["wmu"].shape[0]
    seg, To = T + 2, T - 2
    W = B * seg

    # 1.0 on data columns of the slab, 0.0 on per-segment zero-boundary columns.
    pos = jnp.arange(W, dtype=jnp.int32) % seg
    mask = ((pos >= 1) & (pos <= T)).astype(jnp.float32)[None, :]       # (1, W)

    args = (x,
            kp["w1"], kp["b1"], kp["w2"], kp["b2"], kp["w3"], kp["b3"],
            kp["w4"], kp["b4"], kp["wmu"], kp["bmu"], kp["wlv"], kp["blv"],
            mask)

    flops = 2 * (C * (2 * C) * (W - 1)          # conv1
                 + 2 * C * (3 * C) * (W - 2)    # conv2 + conv3
                 + C * (3 * C) * (W - 4)        # conv4
                 + 2 * Z * C * (W - 4))         # mu + log_var heads
    bytes_accessed = 4 * (x.size + sum(int(v.size) for v in kp.values())
                          + W + 2 * Z * B * To)
    cost = pl.CostEstimate(flops=int(flops), transcendentals=0,
                           bytes_accessed=int(bytes_accessed))

    # Gridless pallas_call: every operand/output is a whole-array VMEM-resident
    # ref (default BlockSpec), intermediates never leave VMEM, single program.
    # (At these shapes a 2-TC v7x split would give each core <128 lanes of work,
    #  so we deliberately keep a single program per the review.)
    mu_flat, lv_flat = pl.pallas_call(
        _conv_encoder_kernel,
        out_shape=(jax.ShapeDtypeStruct((Z, B * To), jnp.float32),
                   jax.ShapeDtypeStruct((Z, B * To), jnp.float32)),
        scratch_shapes=[pltpu.VMEM((C, W), jnp.float32)],
        compiler_params=pltpu.CompilerParams(
            vmem_limit_bytes=32 * 1024 * 1024),
        cost_estimate=cost,
    )(*args)

    # Layout plumbing only: (Z, B*To) -> (B, Z, To).
    mu = mu_flat.reshape(Z, B, To).transpose(1, 0, 2)
    log_var = lv_flat.reshape(Z, B, To).transpose(1, 0, 2)
    return mu, log_var


# ---------------------------------------------------------------------------
# Parameters (PyTorch Conv1d layout + packing into the fused-kernel layout)
# ---------------------------------------------------------------------------
def _init_conv(key, c_out, c_in, k):
    """Mimic torch.nn.Conv1d default init: U(-1/sqrt(c_in*k), +1/sqrt(c_in*k))."""
    kw, kb = jax.random.split(key)
    bound = 1.0 / float(c_in * k) ** 0.5
    w = jax.random.uniform(kw, (c_out, c_in, k), jnp.float32, -bound, bound)
    b = jax.random.uniform(kb, (c_out,), jnp.float32, -bound, bound)
    return w, b


def make_torch_params(key, dim_x, dim_z):
    keys = jax.random.split(key, 6)
    return {
        "conv1": _init_conv(keys[0], dim_x, dim_x, 2),
        "conv2": _init_conv(keys[1], dim_x, dim_x, 3),
        "conv3": _init_conv(keys[2], dim_x, dim_x, 3),
        "conv4": _init_conv(keys[3], dim_x, dim_x, 3),
        "conv_mu": _init_conv(keys[4], dim_z, dim_x, 1),
        "conv_log_var": _init_conv(keys[5], dim_z, dim_x, 1),
    }
    # NOTE: ff1..ff4 / gelu exist in the PyTorch module but are unused in forward().


def pack_kernel_params(p):
    """PyTorch (C_out, C_in, K) conv weights -> tap-fused kernel layout."""
    def taps_concat(w):   # (C_out, C_in, K) -> (C_out, K*C_in), tap-major blocks
        return jnp.concatenate([w[:, :, k] for k in range(w.shape[2])], axis=1)

    def col(b):           # (C_out,) -> (C_out, 1)
        return b.reshape(-1, 1)

    return {
        "w1": taps_concat(p["conv1"][0]), "b1": col(p["conv1"][1]),
        "w2": taps_concat(p["conv2"][0]), "b2": col(p["conv2"][1]),
        "w3": taps_concat(p["conv3"][0]), "b3": col(p["conv3"][1]),
        "w4": taps_concat(p["conv4"][0]), "b4": col(p["conv4"][1]),
        "wmu": p["conv_mu"][0][:, :, 0], "bmu": col(p["conv_mu"][1]),
        "wlv": p["conv_log_var"][0][:, :, 0], "blv": col(p["conv_log_var"][1]),
    }


# ---------------------------------------------------------------------------
# Pure-JAX reference (PyTorch Conv1d semantics) for sanity checking
# ---------------------------------------------------------------------------
def conv_encoder_forward_ref(p, x):
    def conv1d(h, w, b, pad):
        y = jax.lax.conv_general_dilated(
            h, w, window_strides=(1,), padding=[pad],
            dimension_numbers=("NCH", "OIH", "NCH"),
            precision=jax.lax.Precision.HIGHEST)
        return y + b[None, :, None]

    h = conv1d(x, *p["conv1"], (0, 1))     # padding='same', k=2 -> torch pads (0,1)
    h = conv1d(h, *p["conv2"], (1, 1))
    h = conv1d(h, *p["conv3"], (1, 1))
    h = conv1d(h, *p["conv4"], (0, 0))     # valid
    mu = conv1d(h, *p["conv_mu"], (0, 0))
    log_var = conv1d(h, *p["conv_log_var"], (0, 0))
    return mu, log_var


if __name__ == "__main__":
    # Small shapes consistent with the module: x is (batch, dim_x, time_window).
    dim_x, dim_z, time_window, batch = 8, 4, 16, 2

    root = jax.random.PRNGKey(0)
    k_params, k_x = jax.random.split(root)
    torch_params = make_torch_params(k_params, dim_x, dim_z)
    kparams = pack_kernel_params(torch_params)
    x = jax.random.normal(k_x, (batch, dim_x, time_window), jnp.float32)

    mu, log_var = conv_encoder_forward(kparams, x)
    mu = jax.block_until_ready(mu)
    log_var = jax.block_until_ready(log_var)

    mu_ref, lv_ref = conv_encoder_forward_ref(torch_params, x)
    assert mu.shape == (batch, dim_z, time_window - 2)
    assert log_var.shape == (batch, dim_z, time_window - 2)
    assert jnp.allclose(mu, mu_ref, atol=2e-3, rtol=2e-3), \
        float(jnp.max(jnp.abs(mu - mu_ref)))
    assert jnp.allclose(log_var, lv_ref, atol=2e-3, rtol=2e-3), \
        float(jnp.max(jnp.abs(log_var - lv_ref)))

    print("KERNEL_OK")
</pallas_src>

<mosaic_0001>
module attributes {stable_mosaic.version = 11 : i64} {
  func.func @_conv_encoder_kernel(%arg0: memref<2x8x16xf32, #tpu.memory_space<vmem>>, %arg1: memref<8x16xf32, #tpu.memory_space<vmem>>, %arg2: memref<8x1xf32, #tpu.memory_space<vmem>>, %arg3: memref<8x24xf32, #tpu.memory_space<vmem>>, %arg4: memref<8x1xf32, #tpu.memory_space<vmem>>, %arg5: memref<8x24xf32, #tpu.memory_space<vmem>>, %arg6: memref<8x1xf32, #tpu.memory_space<vmem>>, %arg7: memref<8x24xf32, #tpu.memory_space<vmem>>, %arg8: memref<8x1xf32, #tpu.memory_space<vmem>>, %arg9: memref<4x8xf32, #tpu.memory_space<vmem>>, %arg10: memref<4x1xf32, #tpu.memory_space<vmem>>, %arg11: memref<4x8xf32, #tpu.memory_space<vmem>>, %arg12: memref<4x1xf32, #tpu.memory_space<vmem>>, %arg13: memref<1x36xf32, #tpu.memory_space<vmem>>, %arg14: memref<4x28xf32, #tpu.memory_space<vmem>>, %arg15: memref<4x28xf32, #tpu.memory_space<vmem>>, %arg16: memref<8x36xf32, #tpu.memory_space<vmem>>) attributes {dimension_semantics = [], scalar_prefetch = 0 : i64, scratch_operands = 1 : i64, tpu.core_type = #tpu.core_type<tc>} {
    %c0 = arith.constant 0 : index
    %c0_0 = arith.constant 0 : index
    %0 = vector.load %arg13[%c0, %c0_0] : memref<1x36xf32, #tpu.memory_space<vmem>>, vector<1x36xf32>
    %cst = arith.constant 0.000000e+00 : f32
    %1 = vector.broadcast %cst : f32 to vector<8x36xf32>
    %c0_1 = arith.constant 0 : index
    %c0_2 = arith.constant 0 : index
    %2 = vector.load %arg16[%c0_1, %c0_2] : memref<8x36xf32, #tpu.memory_space<vmem>>, vector<8x36xf32>
    tpu.vector_store %arg16[%c0_1, %c0_2], %1 {strides = array<i32>} : memref<8x36xf32, #tpu.memory_space<vmem>>, vector<8x36xf32>,
    %c0_3 = arith.constant 0 : index
    %c0_4 = arith.constant 0 : index
    %c0_5 = arith.constant 0 : index
    %3 = vector.load %arg0[%c0_3, %c0_4, %c0_5] : memref<2x8x16xf32, #tpu.memory_space<vmem>>, vector<1x8x16xf32>
    %4 = vector.shape_cast %3 : vector<1x8x16xf32> to vector<8x16xf32>
    %c0_6 = arith.constant 0 : index
    %c1 = arith.constant 1 : index
    %5 = vector.load %arg16[%c0_6, %c1] : memref<8x36xf32, #tpu.memory_space<vmem>>, vector<8x16xf32>
    tpu.vector_store %arg16[%c0_6, %c1], %4 {strides = array<i32>} : memref<8x36xf32, #tpu.memory_space<vmem>>, vector<8x16xf32>,
    %c1_7 = arith.constant 1 : index
    %c0_8 = arith.constant 0 : index
    %c0_9 = arith.constant 0 : index
    %6 = vector.load %arg0[%c1_7, %c0_8, %c0_9] : memref<2x8x16xf32, #tpu.memory_space<vmem>>, vector<1x8x16xf32>
    %7 = vector.shape_cast %6 : vector<1x8x16xf32> to vector<8x16xf32>
    %c0_10 = arith.constant 0 : index
    %c19 = arith.constant 19 : index
    %8 = vector.load %arg16[%c0_10, %c19] : memref<8x36xf32, #tpu.memory_space<vmem>>, vector<8x16xf32>
    tpu.vector_store %arg16[%c0_10, %c19], %7 {strides = array<i32>} : memref<8x36xf32, #tpu.memory_space<vmem>>, vector<8x16xf32>,
    %c0_11 = arith.constant 0 : index
    %c0_12 = arith.constant 0 : index
    %9 = vector.load %arg16[%c0_11, %c0_12] : memref<8x36xf32, #tpu.memory_space<vmem>>, vector<8x36xf32>
    %10 = vector.extract_strided_slice %9 {offsets = [0, 0], sizes = [8, 35], strides = [1, 1]} : vector<8x36xf32> to vector<8x35xf32>
    %11 = vector.extract_strided_slice %9 {offsets = [0, 1], sizes = [8, 35], strides = [1, 1]} : vector<8x36xf32> to vector<8x35xf32>
    %12 = tpu.concatenate %10, %11 in 0 : vector<8x35xf32>, vector<8x35xf32> -> vector<16x35xf32>
    %c0_13 = arith.constant 0 : index
    %c0_14 = arith.constant 0 : index
    %13 = vector.load %arg1[%c0_13, %c0_14] : memref<8x16xf32, #tpu.memory_space<vmem>>, vector<8x16xf32>
    %cst_15 = arith.constant dense<0.000000e+00> : vector<8x35xf32>
    %14 = tpu.matmul %13, %12, %cst_15 {dimension_numbers = #tpu.dot_dimension_numbers<[1], [0], [0], [1], [0, 0, 1, 1], [], []>} : vector<8x16xf32>, vector<16x35xf32>, vector<8x35xf32> -> vector<8x35xf32>
    %c0_16 = arith.constant 0 : index
    %c0_17 = arith.constant 0 : index
    %15 = vector.load %arg2[%c0_16, %c0_17] : memref<8x1xf32, #tpu.memory_space<vmem>>, vector<8x1xf32>
    %16 = vector.broadcast %15 : vector<8x1xf32> to vector<8x35xf32>
    %17 = arith.addf %14, %16 : vector<8x35xf32>
    %18 = vector.extract_strided_slice %0 {offsets = [0, 0], sizes = [1, 35], strides = [1, 1]} : vector<1x36xf32> to vector<1x35xf32>
    %19 = vector.broadcast %18 : vector<1x35xf32> to vector<8x35xf32>
    %20 = arith.mulf %17, %19 : vector<8x35xf32>
    %c0_18 = arith.constant 0 : index
    %c0_19 = arith.constant 0 : index
    %21 = vector.load %arg16[%c0_18, %c0_19] : memref<8x36xf32, #tpu.memory_space<vmem>>, vector<8x35xf32>
    tpu.vector_store %arg16[%c0_18, %c0_19], %20 {strides = array<i32>} : memref<8x36xf32, #tpu.memory_space<vmem>>, vector<8x35xf32>,
    %c0_20 = arith.constant 0 : index
    %c0_21 = arith.constant 0 : index
    %22 = vector.load %arg16[%c0_20, %c0_21] : memref<8x36xf32, #tpu.memory_space<vmem>>, vector<8x36xf32>
    %23 = vector.extract_strided_slice %22 {offsets = [0, 0], sizes = [8, 34], strides = [1, 1]} : vector<8x36xf32> to vector<8x34xf32>
    %24 = vector.extract_strided_slice %22 {offsets = [0, 1], sizes = [8, 34], strides = [1, 1]} : vector<8x36xf32> to vector<8x34xf32>
    %25 = vector.extract_strided_slice %22 {offsets = [0, 2], sizes = [8, 34], strides = [1, 1]} : vector<8x36xf32> to vector<8x34xf32>
    %26 = tpu.concatenate %23, %24, %25 in 0 : vector<8x34xf32>, vector<8x34xf32>, vector<8x34xf32> -> vector<24x34xf32>
    %c0_22 = arith.constant 0 : index
    %c0_23 = arith.constant 0 : index
    %27 = vector.load %arg3[%c0_22, %c0_23] : memref<8x24xf32, #tpu.memory_space<vmem>>, vector<8x24xf32>
    %cst_24 = arith.constant dense<0.000000e+00> : vector<8x34xf32>
    %28 = tpu.matmul %27, %26, %cst_24 {dimension_numbers = #tpu.dot_dimension_numbers<[1], [0], [0], [1], [0, 0, 1, 1], [], []>} : vector<8x24xf32>, vector<24x34xf32>, vector<8x34xf32> -> vector<8x34xf32>
    %c0_25 = arith.constant 0 : index
    %c0_26 = arith.constant 0 : index
    %29 = vector.load %arg4[%c0_25, %c0_26] : memref<8x1xf32, #tpu.memory_space<vmem>>, vector<8x1xf32>
    %30 = vector.broadcast %29 : vector<8x1xf32> to vector<8x34xf32>
    %31 = arith.addf %28, %30 : vector<8x34xf32>
    %32 = vector.extract_strided_slice %0 {offsets = [0, 1], sizes = [1, 34], strides = [1, 1]} : vector<1x36xf32> to vector<1x34xf32>
    %33 = vector.broadcast %32 : vector<1x34xf32> to vector<8x34xf32>
    %34 = arith.mulf %31, %33 : vector<8x34xf32>
    %c0_27 = arith.constant 0 : index
    %c1_28 = arith.constant 1 : index
    %35 = vector.load %arg16[%c0_27, %c1_28] : memref<8x36xf32, #tpu.memory_space<vmem>>, vector<8x34xf32>
    tpu.vector_store %arg16[%c0_27, %c1_28], %34 {strides = array<i32>} : memref<8x36xf32, #tpu.memory_space<vmem>>, vector<8x34xf32>,
    %c0_29 = arith.constant 0 : index
    %c0_30 = arith.constant 0 : index
    %36 = vector.load %arg16[%c0_29, %c0_30] : memref<8x36xf32, #tpu.memory_space<vmem>>, vector<8x36xf32>
    %37 = vector.extract_strided_slice %36 {offsets = [0, 0], sizes = [8, 34], strides = [1, 1]} : vector<8x36xf32> to vector<8x34xf32>
    %38 = vector.extract_strided_slice %36 {offsets = [0, 1], sizes = [8, 34], strides = [1, 1]} : vector<8x36xf32> to vector<8x34xf32>
    %39 = vector.extract_strided_slice %36 {offsets = [0, 2], sizes = [8, 34], strides = [1, 1]} : vector<8x36xf32> to vector<8x34xf32>
    %40 = tpu.concatenate %37, %38, %39 in 0 : vector<8x34xf32>, vector<8x34xf32>, vector<8x34xf32> -> vector<24x34xf32>
    %c0_31 = arith.constant 0 : index
    %c0_32 = arith.constant 0 : index
    %41 = vector.load %arg5[%c0_31, %c0_32] : memref<8x24xf32, #tpu.memory_space<vmem>>, vector<8x24xf32>
    %cst_33 = arith.constant dense<0.000000e+00> : vector<8x34xf32>
    %42 = tpu.matmul %41, %40, %cst_33 {dimension_numbers = #tpu.dot_dimension_numbers<[1], [0], [0], [1], [0, 0, 1, 1], [], []>} : vector<8x24xf32>, vector<24x34xf32>, vector<8x34xf32> -> vector<8x34xf32>
    %c0_34 = arith.constant 0 : index
    %c0_35 = arith.constant 0 : index
    %43 = vector.load %arg6[%c0_34, %c0_35] : memref<8x1xf32, #tpu.memory_space<vmem>>, vector<8x1xf32>
    %44 = vector.broadcast %43 : vector<8x1xf32> to vector<8x34xf32>
    %45 = arith.addf %42, %44 : vector<8x34xf32>
    %46 = vector.extract_strided_slice %45 {offsets = [0, 0], sizes = [8, 32], strides = [1, 1]} : vector<8x34xf32> to vector<8x32xf32>
    %47 = vector.extract_strided_slice %45 {offsets = [0, 1], sizes = [8, 32], strides = [1, 1]} : vector<8x34xf32> to vector<8x32xf32>
    %48 = vector.extract_strided_slice %45 {offsets = [0, 2], sizes = [8, 32], strides = [1, 1]} : vector<8x34xf32> to vector<8x32xf32>
    %49 = tpu.concatenate %46, %47, %48 in 0 : vector<8x32xf32>, vector<8x32xf32>, vector<8x32xf32> -> vector<24x32xf32>
    %c0_36 = arith.constant 0 : index
    %c0_37 = arith.constant 0 : index
    %50 = vector.load %arg7[%c0_36, %c0_37] : memref<8x24xf32, #tpu.memory_space<vmem>>, vector<8x24xf32>
    %cst_38 = arith.constant dense<0.000000e+00> : vector<8x32xf32>
    %51 = tpu.matmul %50, %49, %cst_38 {dimension_numbers = #tpu.dot_dimension_numbers<[1], [0], [0], [1], [0, 0, 1, 1], [], []>} : vector<8x24xf32>, vector<24x32xf32>, vector<8x32xf32> -> vector<8x32xf32>
    %c0_39 = arith.constant 0 : index
    %c0_40 = arith.constant 0 : index
    %52 = vector.load %arg8[%c0_39, %c0_40] : memref<8x1xf32, #tpu.memory_space<vmem>>, vector<8x1xf32>
    %53 = vector.broadcast %52 : vector<8x1xf32> to vector<8x32xf32>
    %54 = arith.addf %51, %53 : vector<8x32xf32>
    %c0_41 = arith.constant 0 : index
    %c0_42 = arith.constant 0 : index
    %55 = vector.load %arg9[%c0_41, %c0_42] : memref<4x8xf32, #tpu.memory_space<vmem>>, vector<4x8xf32>
    %cst_43 = arith.constant dense<0.000000e+00> : vector<4x32xf32>
    %56 = tpu.matmul %55, %54, %cst_43 {dimension_numbers = #tpu.dot_dimension_numbers<[1], [0], [0], [1], [0, 0, 1, 1], [], []>} : vector<4x8xf32>, vector<8x32xf32>, vector<4x32xf32> -> vector<4x32xf32>
    %c0_44 = arith.constant 0 : index
    %c0_45 = arith.constant 0 : index
    %57 = vector.load %arg10[%c0_44, %c0_45] : memref<4x1xf32, #tpu.memory_space<vmem>>, vector<4x1xf32>
    %58 = vector.broadcast %57 : vector<4x1xf32> to vector<4x32xf32>
    %59 = arith.addf %56, %58 : vector<4x32xf32>
    %c0_46 = arith.constant 0 : index
    %c0_47 = arith.constant 0 : index
    %60 = vector.load %arg11[%c0_46, %c0_47] : memref<4x8xf32, #tpu.memory_space<vmem>>, vector<4x8xf32>
    %cst_48 = arith.constant dense<0.000000e+00> : vector<4x32xf32>
    %61 = tpu.matmul %60, %54, %cst_48 {dimension_numbers = #tpu.dot_dimension_numbers<[1], [0], [0], [1], [0, 0, 1, 1], [], []>} : vector<4x8xf32>, vector<8x32xf32>, vector<4x32xf32> -> vector<4x32xf32>
    %c0_49 = arith.constant 0 : index
    %c0_50 = arith.constant 0 : index
    %62 = vector.load %arg12[%c0_49, %c0_50] : memref<4x1xf32, #tpu.memory_space<vmem>>, vector<4x1xf32>
    %63 = vector.broadcast %62 : vector<4x1xf32> to vector<4x32xf32>
    %64 = arith.addf %61, %63 : vector<4x32xf32>
    %65 = vector.extract_strided_slice %59 {offsets = [0, 0], sizes = [4, 14], strides = [1, 1]} : vector<4x32xf32> to vector<4x14xf32>
    %c0_51 = arith.constant 0 : index
    %c0_52 = arith.constant 0 : index
    %66 = vector.load %arg14[%c0_51, %c0_52] : memref<4x28xf32, #tpu.memory_space<vmem>>, vector<4x14xf32>
    tpu.vector_store %arg14[%c0_51, %c0_52], %65 {strides = array<i32>} : memref<4x28xf32, #tpu.memory_space<vmem>>, vector<4x14xf32>,
    %67 = vector.extract_strided_slice %64 {offsets = [0, 0], sizes = [4, 14], strides = [1, 1]} : vector<4x32xf32> to vector<4x14xf32>
    %c0_53 = arith.constant 0 : index
    %c0_54 = arith.constant 0 : index
    %68 = vector.load %arg15[%c0_53, %c0_54] : memref<4x28xf32, #tpu.memory_space<vmem>>, vector<4x14xf32>
    tpu.vector_store %arg15[%c0_53, %c0_54], %67 {strides = array<i32>} : memref<4x28xf32, #tpu.memory_space<vmem>>, vector<4x14xf32>,
    %69 = vector.extract_strided_slice %59 {offsets = [0, 18], sizes = [4, 14], strides = [1, 1]} : vector<4x32xf32> to vector<4x14xf32>
    %c0_55 = arith.constant 0 : index
    %c14 = arith.constant 14 : index
    %70 = vector.load %arg14[%c0_55, %c14] : memref<4x28xf32, #tpu.memory_space<vmem>>, vector<4x14xf32>
    tpu.vector_store %arg14[%c0_55, %c14], %69 {strides = array<i32>} : memref<4x28xf32, #tpu.memory_space<vmem>>, vector<4x14xf32>,
    %71 = vector.extract_strided_slice %64 {offsets = [0, 18], sizes = [4, 14], strides = [1, 1]} : vector<4x32xf32> to vector<4x14xf32>
    %c0_56 = arith.constant 0 : index
    %c14_57 = arith.constant 14 : index
    %72 = vector.load %arg15[%c0_56, %c14_57] : memref<4x28xf32, #tpu.memory_space<vmem>>, vector<4x14xf32>
    tpu.vector_store %arg15[%c0_56, %c14_57], %71 {strides = array<i32>} : memref<4x28xf32, #tpu.memory_space<vmem>>, vector<4x14xf32>,
    return
  }
}

</mosaic_0001>

<llo_original>
// kernel: conv_encoder_forward.1
$region0: #{conv_encoder_forward.1}
  #allocation0 [shape = 'u32[]', space=smem, size = 0x4, offset = 0x4, fixed_abs, tag = 'smem constant byte address 0x4 - core index']
  #allocation1 [shape = 'u32[144,128]{1,0:T(1,128)}', space=vmem, size = 0x12000, scoped, tag = 'internal scratch']
  #allocation2 [shape = 'f32[8,36]{1,0:T(8,128)}', space=vmem, size = 0x1000, scoped, tag = 'scratch operand']
  %s0 = inlined_call_operand.vmem [shape: f32[2,8,16], index: 0, kind: input, shape index: {}]
  %s1 = inlined_call_operand.vmem [shape: f32[8,16], index: 1, kind: input, shape index: {}]
  %s2 = inlined_call_operand.vmem [shape: f32[8,1], index: 2, kind: input, shape index: {}]
  %s3 = inlined_call_operand.vmem [shape: f32[8,24], index: 3, kind: input, shape index: {}]
  %s4 = inlined_call_operand.vmem [shape: f32[8,1], index: 4, kind: input, shape index: {}]
  %s5 = inlined_call_operand.vmem [shape: f32[8,24], index: 5, kind: input, shape index: {}]
  %s6 = inlined_call_operand.vmem [shape: f32[8,1], index: 6, kind: input, shape index: {}]
  %s7 = inlined_call_operand.vmem [shape: f32[8,24], index: 7, kind: input, shape index: {}]
  %s8 = inlined_call_operand.vmem [shape: f32[8,1], index: 8, kind: input, shape index: {}]
  %s9 = inlined_call_operand.vmem [shape: f32[4,8], index: 9, kind: input, shape index: {}]
  %s10 = inlined_call_operand.vmem [shape: f32[4,1], index: 10, kind: input, shape index: {}]
  %s11 = inlined_call_operand.vmem [shape: f32[4,8], index: 11, kind: input, shape index: {}]
  %s12 = inlined_call_operand.vmem [shape: f32[4,1], index: 12, kind: input, shape index: {}]
  %s13 = inlined_call_operand.vmem [shape: f32[1,36], index: 13, kind: input, shape index: {}]
  %s14 = inlined_call_operand.vmem [shape: f32[4,28], index: 14, kind: output, shape index: {0}]
  %s15 = inlined_call_operand.vmem [shape: f32[4,28], index: 15, kind: output, shape index: {1}]
  %16 = xla_tuple %s14, %s15
  %s17 = sld [smem:[#allocation0]]
  $region74: #{conv_encoder_forward.1} parent=0
    _
  %s19 = ssub.s32 1, %s17
  %s20 = scalar_select 0, %s19, %s17
  // Predicated region
  $region2: #{conv_encoder_forward.1} parent=0 // pred_check
    _
  $region3: #{conv_encoder_forward.1} parent=0 // pred_check_branch
    %22 = sbr.rel (0) target = $region5
  $region4: #{conv_encoder_forward.1} parent=0 // pred_region
    _
  $region5: #{conv_encoder_forward.1} parent=0 // pred_fallthru
    _
  // Predicated region
  $region6: #{conv_encoder_forward.1} parent=0 // pred_check
    _
  $region7: #{conv_encoder_forward.1} parent=0 // pred_check_branch
    %24 = sbr.rel (0) target = $region9
  $region8: #{conv_encoder_forward.1} parent=0 // pred_region
    _
  $region9: #{conv_encoder_forward.1} parent=0 // pred_fallthru
    _
  // Predicated region
  $region10: #{conv_encoder_forward.1} parent=0 // pred_check
    _
  $region11: #{conv_encoder_forward.1} parent=0 // pred_check_branch
    %26 = sbr.rel (0) target = $region13
  $region12: #{conv_encoder_forward.1} parent=0 // pred_region
    _
  $region13: #{conv_encoder_forward.1} parent=0 // pred_fallthru
    _
  // Predicated region
  $region14: #{conv_encoder_forward.1} parent=0 // pred_check
    _
  $region15: #{conv_encoder_forward.1} parent=0 // pred_check_branch
    %28 = sbr.rel (0) target = $region17
  $region16: #{conv_encoder_forward.1} parent=0 // pred_region
    _
  $region17: #{conv_encoder_forward.1} parent=0 // pred_fallthru
    _
  // Predicated region
  $region18: #{conv_encoder_forward.1} parent=0 // pred_check
    _
  $region19: #{conv_encoder_forward.1} parent=0 // pred_check_branch
    %30 = sbr.rel (0) target = $region21
  $region20: #{conv_encoder_forward.1} parent=0 // pred_region
    _
  $region21: #{conv_encoder_forward.1} parent=0 // pred_fallthru
    _
  // Predicated region
  $region22: #{conv_encoder_forward.1} parent=0 // pred_check
    _
  $region23: #{conv_encoder_forward.1} parent=0 // pred_check_branch
    %32 = sbr.rel (0) target = $region25
  $region24: #{conv_encoder_forward.1} parent=0 // pred_region
    _
  $region25: #{conv_encoder_forward.1} parent=0 // pred_fallthru
    _
  // Predicated region
  $region26: #{conv_encoder_forward.1} parent=0 // pred_check
    _
  $region27: #{conv_encoder_forward.1} parent=0 // pred_check_branch
    %34 = sbr.rel (0) target = $region29
  $region28: #{conv_encoder_forward.1} parent=0 // pred_region
    _
  $region29: #{conv_encoder_forward.1} parent=0 // pred_fallthru
    _
  // Predicated region
  $region30: #{conv_encoder_forward.1} parent=0 // pred_check
    _
  $region31: #{conv_encoder_forward.1} parent=0 // pred_check_branch
    %36 = sbr.rel (0) target = $region33
  $region32: #{conv_encoder_forward.1} parent=0 // pred_region
    _
  $region33: #{conv_encoder_forward.1} parent=0 // pred_fallthru
    _
  // Predicated region
  $region34: #{conv_encoder_forward.1} parent=0 // pred_check
    _
  $region35: #{conv_encoder_forward.1} parent=0 // pred_check_branch
    %38 = sbr.rel (0) target = $region37
  $region36: #{conv_encoder_forward.1} parent=0 // pred_region
    _
  $region37: #{conv_encoder_forward.1} parent=0 // pred_fallthru
    _
  // Predicated region
  $region38: #{conv_encoder_forward.1} parent=0 // pred_check
    _
  $region39: #{conv_encoder_forward.1} parent=0 // pred_check_branch
    %40 = sbr.rel (0) target = $region41
  $region40: #{conv_encoder_forward.1} parent=0 // pred_region
    _
  $region41: #{conv_encoder_forward.1} parent=0 // pred_fallthru
    _
  // Predicated region
  $region42: #{conv_encoder_forward.1} parent=0 // pred_check
    _
  $region43: #{conv_encoder_forward.1} parent=0 // pred_check_branch
    %42 = sbr.rel (0) target = $region45
  $region44: #{conv_encoder_forward.1} parent=0 // pred_region
    _
  $region45: #{conv_encoder_forward.1} parent=0 // pred_fallthru
    _
  // Predicated region
  $region46: #{conv_encoder_forward.1} parent=0 // pred_check
    _
  $region47: #{conv_encoder_forward.1} parent=0 // pred_check_branch
    %44 = sbr.rel (0) target = $region49
  $region48: #{conv_encoder_forward.1} parent=0 // pred_region
    _
  $region49: #{conv_encoder_forward.1} parent=0 // pred_fallthru
    _
  // Predicated region
  $region50: #{conv_encoder_forward.1} parent=0 // pred_check
    _
  $region51: #{conv_encoder_forward.1} parent=0 // pred_check_branch
    %46 = sbr.rel (0) target = $region53
  $region52: #{conv_encoder_forward.1} parent=0 // pred_region
    _
  $region53: #{conv_encoder_forward.1} parent=0 // pred_fallthru
    _
  // Predicated region
  $region54: #{conv_encoder_forward.1} parent=0 // pred_check
    _
  $region55: #{conv_encoder_forward.1} parent=0 // pred_check_branch
    %48 = sbr.rel (0) target = $region57
  $region56: #{conv_encoder_forward.1} parent=0 // pred_region
    _
  $region57: #{conv_encoder_forward.1} parent=0 // pred_fallthru
    _
  %v49 = vld [vmem:[%s13] sm:$0x1]
  %vm50 = vcmask 293888
  %51 = vst.msk [vmem:[#allocation2] sm:$0xff] %vm50, 0.0
  %v52 = vld [vmem:[%s0] sm:$0xff]
  %54 = vrot.lane.b32.xlu0 %v52, 1
  %v55 = vpop.permute.xlu0 %54
  %vm57 = vcmask 138248
  %58 = vst.msk [vmem:[#allocation2] sm:$0xff] %vm57, %v55
  %s59 = scalar_lea.vmem %s0, 8
  %v60 = vld [vmem:[%s59] sm:$0xff]
  %62 = vrot.lane.b32.xlu0 %v60, 19
  %v63 = vpop.permute.xlu0 %62
  %vm65 = vcmask 285848
  %66 = vst.msk [vmem:[#allocation2] sm:$0xff] %vm65, %v63
  %v67 = vld [vmem:[#allocation2] sm:$0xff]
  %69 = vrot.lane.b32.xlu0 %v67, 127
  %v70 = vpop.permute.xlu0 %69
  %v72 = vld [vmem:[%s1] sm:$0xff]
  %v73 = vld [vmem:[%s2] sm:$0xff]
  %75 = vset.pattern.permute.xlu0 0
  %76 = vperm.xlu0 %75, %v73
  %v77 = vpop.permute.xlu0 %76
  %vm79 = vcmask 130048
  %v81 = vsel %vm79, %v72, 0
  %83 = vmatprep.subr.mxu0 0.0
  %84 = vmatpush1.msra.mxu0 0.0
  %85 = vmatprep.subr.mxu0 0.0
  %86 = vmatpush1.msra.mxu0 0.0
  %87 = vmatprep.subr.mxu0 0.0
  %88 = vmatpush1.msra.mxu0 0.0
  %89 = vmatprep.subr.mxu0 0.0
  %90 = vmatpush1.msra.mxu0 0.0
  %91 = vmatprep.subr.mxu0 0.0
  %92 = vmatpush1.msra.mxu0 0.0
  %93 = vmatprep.subr.mxu0 0.0
  %94 = vmatpush1.msra.mxu0 0.0
  %95 = vmatprep.subr.mxu0 0.0
  %96 = vmatpush1.msra.mxu0 0.0
  %97 = vmatprep.subr.mxu0 0.0
  %98 = vmatpush1.msra.mxu0 0.0
  %99 = vmatprep.subr.mxu0 0.0
  %100 = vmatpush1.msra.mxu0 0.0
  %101 = vmatprep.subr.mxu0 0.0
  %102 = vmatpush1.msra.mxu0 0.0
  %103 = vmatprep.subr.mxu0 0.0
  %104 = vmatpush1.msra.mxu0 0.0
  %105 = vmatprep.subr.mxu0 0.0
  %106 = vmatpush1.msra.mxu0 0.0
  %107 = vmatprep.subr.mxu0 0.0
  %108 = vmatpush1.msra.mxu0 0.0
  %109 = vmatprep.subr.mxu0 0.0
  %110 = vmatpush1.msra.mxu0 0.0
  %111 = vmatprep.subr.mxu0 0.0
  %112 = vmatpush1.msra.mxu0 %v70
  %113 = vmatprep.subr.mxu0 0.0
  %114 = vmatpush1.msra.mxu0 %v67
  %115 = vmatprep.subr.mxu0 0.0
  %116 = vmatpush2.msra.mxu0 0.0
  %117 = vmatprep.subr.mxu0 0.0
  %118 = vmatpush2.msra.mxu0 0.0
  %119 = vmatprep.subr.mxu0 0.0
  %120 = vmatpush2.msra.mxu0 0.0
  %121 = vmatprep.subr.mxu0 0.0
  %122 = vmatpush2.msra.mxu0 0.0
  %123 = vmatprep.subr.mxu0 0.0
  %124 = vmatpush2.msra.mxu0 0.0
  %125 = vmatprep.subr.mxu0 0.0
  %126 = vmatpush2.msra.mxu0 0.0
  %127 = vmatprep.subr.mxu0 0.0
  %128 = vmatpush2.msra.mxu0 0.0
  %129 = vmatprep.subr.mxu0 0.0
  %130 = vmatpush2.msra.mxu0 0.0
  %131 = vmatprep.subr.mxu0 0.0
  %132 = vmatpush2.msra.mxu0 0.0
  %133 = vmatprep.subr.mxu0 0.0
  %134 = vmatpush2.msra.mxu0 0.0
  %135 = vmatprep.subr.mxu0 0.0
  %136 = vmatpush2.msra.mxu0 0.0
  %137 = vmatprep.subr.mxu0 0.0
  %138 = vmatpush2.msra.mxu0 0.0
  %139 = vmatprep.subr.mxu0 0.0
  %140 = vmatpush2.msra.mxu0 0.0
  %141 = vmatprep.subr.mxu0 0.0
  %142 = vmatpush2.msra.mxu0 0.0
  %143 = vmatprep.subr.mxu0 0.0
  %144 = vmatpush2.msra.mxu0 0.0
  %145 = vmatprep.subr.mxu0 0.0
  %146 = vmatpush2.msra.mxu0 0.0
  %147 = vmatprep.mubr.f32.mxu0 0.0
  %148 = vmatmul.mubr.f32.gmra.mxu0 %v81
  %v149 = vpop.f32.mrf.mxu0
  %v150 = vadd.f32 %v77, %v149
  %v151 = vpop.f32.mrf.mxu0
  %152 = vdwg.mxu0
  %v154 = vlaneseq
  %v155 = vshrl.u32 %v154, 7
  %v156 = vsub.s32 0, %v155
  %v157 = vrot.slane %v49, %v156
  %v159 = vmul.f32 %v150, %v157
  %vm160 = vcmask 285696
  %161 = vst.msk [vmem:[#allocation2] sm:$0xff] %vm160, %v159
  %v162 = vld [vmem:[#allocation2] sm:$0xff]
  %164 = vrot.lane.b32.xlu0 %v162, 127
  %v165 = vpop.permute.xlu0 %164
  %167 = vrot.lane.b32.xlu0 %v162, 126
  %v168 = vpop.permute.xlu0 %167
  %v170 = vld [vmem:[%s3] sm:$0xff]
  %v171 = vld [vmem:[%s4] sm:$0xff]
  %173 = vset.pattern.permute.xlu0 0
  %174 = vperm.xlu0 %173, %v171
  %v175 = vpop.permute.xlu0 %174
  %vm177 = vcmask 195584
  %v179 = vsel %vm177, %v170, 0
  %181 = vmatprep.subr.mxu0 0.0
  %182 = vmatpush1.msra.mxu0 0.0
  %183 = vmatprep.subr.mxu0 0.0
  %184 = vmatpush1.msra.mxu0 0.0
  %185 = vmatprep.subr.mxu0 0.0
  %186 = vmatpush1.msra.mxu0 0.0
  %187 = vmatprep.subr.mxu0 0.0
  %188 = vmatpush1.msra.mxu0 0.0
  %189 = vmatprep.subr.mxu0 0.0
  %190 = vmatpush1.msra.mxu0 0.0
  %191 = vmatprep.subr.mxu0 0.0
  %192 = vmatpush1.msra.mxu0 0.0
  %193 = vmatprep.subr.mxu0 0.0
  %194 = vmatpush1.msra.mxu0 0.0
  %195 = vmatprep.subr.mxu0 0.0
  %196 = vmatpush1.msra.mxu0 0.0
  %197 = vmatprep.subr.mxu0 0.0
  %198 = vmatpush1.msra.mxu0 0.0
  %199 = vmatprep.subr.mxu0 0.0
  %200 = vmatpush1.msra.mxu0 0.0
  %201 = vmatprep.subr.mxu0 0.0
  %202 = vmatpush1.msra.mxu0 0.0
  %203 = vmatprep.subr.mxu0 0.0
  %204 = vmatpush1.msra.mxu0 0.0
  %205 = vmatprep.subr.mxu0 0.0
  %206 = vmatpush1.msra.mxu0 0.0
  %207 = vmatprep.subr.mxu0 0.0
  %208 = vmatpush1.msra.mxu0 %v168
  %209 = vmatprep.subr.mxu0 0.0
  %210 = vmatpush1.msra.mxu0 %v165
  %211 = vmatprep.subr.mxu0 0.0
  %212 = vmatpush1.msra.mxu0 %v162
  %213 = vmatprep.subr.mxu0 0.0
  %214 = vmatpush2.msra.mxu0 0.0
  %215 = vmatprep.subr.mxu0 0.0
  %216 = vmatpush2.msra.mxu0 0.0
  %217 = vmatprep.subr.mxu0 0.0
  %218 = vmatpush2.msra.mxu0 0.0
  %219 = vmatprep.subr.mxu0 0.0
  %220 = vmatpush2.msra.mxu0 0.0
  %221 = vmatprep.subr.mxu0 0.0
  %222 = vmatpush2.msra.mxu0 0.0
  %223 = vmatprep.subr.mxu0 0.0
  %224 = vmatpush2.msra.mxu0 0.0
  %225 = vmatprep.subr.mxu0 0.0
  %226 = vmatpush2.msra.mxu0 0.0
  %227 = vmatprep.subr.mxu0 0.0
  %228 = vmatpush2.msra.mxu0 0.0
  %229 = vmatprep.subr.mxu0 0.0
  %230 = vmatpush2.msra.mxu0 0.0
  %231 = vmatprep.subr.mxu0 0.0
  %232 = vmatpush2.msra.mxu0 0.0
  %233 = vmatprep.subr.mxu0 0.0
  %234 = vmatpush2.msra.mxu0 0.0
  %235 = vmatprep.subr.mxu0 0.0
  %236 = vmatpush2.msra.mxu0 0.0
  %237 = vmatprep.subr.mxu0 0.0
  %238 = vmatpush2.msra.mxu0 0.0
  %239 = vmatprep.subr.mxu0 0.0
  %240 = vmatpush2.msra.mxu0 0.0
  %241 = vmatprep.subr.mxu0 0.0
  %242 = vmatpush2.msra.mxu0 0.0
  %243 = vmatprep.subr.mxu0 0.0
  %244 = vmatpush2.msra.mxu0 0.0
  %245 = vmatprep.mubr.f32.mxu0 0.0
  %246 = vmatmul.mubr.f32.gmra.mxu0 %v179
  %v247 = vpop.f32.mrf.mxu0
  %v248 = vadd.f32 %v175, %v247
  %v249 = vpop.f32.mrf.mxu0
  %250 = vdwg.mxu0
  %251 = vrot.lane.b32.xlu0 %v157, 127
  %v252 = vpop.permute.xlu0 %251
  %v254 = vmul.f32 %v248, %v252
  %256 = vrot.lane.b32.xlu0 %v254, 1
  %v257 = vpop.permute.xlu0 %256
  %vm259 = vcmask 285704
  %260 = vst.msk [vmem:[#allocation2] sm:$0xff] %vm259, %v257
  %v261 = vld [vmem:[#allocation2] sm:$0xff]
  %263 = vrot.lane.b32.xlu0 %v261, 127
  %v264 = vpop.permute.xlu0 %263
  %266 = vrot.lane.b32.xlu0 %v261, 126
  %v267 = vpop.permute.xlu0 %266
  %v269 = vld [vmem:[%s5] sm:$0xff]
  %v270 = vld [vmem:[%s6] sm:$0xff]
  %272 = vset.pattern.permute.xlu0 0
  %273 = vperm.xlu0 %272, %v270
  %v274 = vpop.permute.xlu0 %273
  %v277 = vsel %vm177, %v269, 0
  %279 = vmatprep.subr.mxu0 0.0
  %280 = vmatpush1.msra.mxu0 0.0
  %281 = vmatprep.subr.mxu0 0.0
  %282 = vmatpush1.msra.mxu0 0.0
  %283 = vmatprep.subr.mxu0 0.0
  %284 = vmatpush1.msra.mxu0 0.0
  %285 = vmatprep.subr.mxu0 0.0
  %286 = vmatpush1.msra.mxu0 0.0
  %287 = vmatprep.subr.mxu0 0.0
  %288 = vmatpush1.msra.mxu0 0.0
  %289 = vmatprep.subr.mxu0 0.0
  %290 = vmatpush1.msra.mxu0 0.0
  %291 = vmatprep.subr.mxu0 0.0
  %292 = vmatpush1.msra.mxu0 0.0
  %293 = vmatprep.subr.mxu0 0.0
  %294 = vmatpush1.msra.mxu0 0.0
  %295 = vmatprep.subr.mxu0 0.0
  %296 = vmatpush1.msra.mxu0 0.0
  %297 = vmatprep.subr.mxu0 0.0
  %298 = vmatpush1.msra.mxu0 0.0
  %299 = vmatprep.subr.mxu0 0.0
  %300 = vmatpush1.msra.mxu0 0.0
  %301 = vmatprep.subr.mxu0 0.0
  %302 = vmatpush1.msra.mxu0 0.0
  %303 = vmatprep.subr.mxu0 0.0
  %304 = vmatpush1.msra.mxu0 0.0
  %305 = vmatprep.subr.mxu0 0.0
  %306 = vmatpush1.msra.mxu0 %v267
  %307 = vmatprep.subr.mxu0 0.0
  %308 = vmatpush1.msra.mxu0 %v264
  %309 = vmatprep.subr.mxu0 0.0
  %310 = vmatpush1.msra.mxu0 %v261
  %311 = vmatprep.subr.mxu0 0.0
  %312 = vmatpush2.msra.mxu0 0.0
  %313 = vmatprep.subr.mxu0 0.0
  %314 = vmatpush2.msra.mxu0 0.0
  %315 = vmatprep.subr.mxu0 0.0
  %316 = vmatpush2.msra.mxu0 0.0
  %317 = vmatprep.subr.mxu0 0.0
  %318 = vmatpush2.msra.mxu0 0.0
  %319 = vmatprep.subr.mxu0 0.0
  %320 = vmatpush2.msra.mxu0 0.0
  %321 = vmatprep.subr.mxu0 0.0
  %322 = vmatpush2.msra.mxu0 0.0
  %323 = vmatprep.subr.mxu0 0.0
  %324 = vmatpush2.msra.mxu0 0.0
  %325 = vmatprep.subr.mxu0 0.0
  %326 = vmatpush2.msra.mxu0 0.0
  %327 = vmatprep.subr.mxu0 0.0
  %328 = vmatpush2.msra.mxu0 0.0
  %329 = vmatprep.subr.mxu0 0.0
  %330 = vmatpush2.msra.mxu0 0.0
  %331 = vmatprep.subr.mxu0 0.0
  %332 = vmatpush2.msra.mxu0 0.0
  %333 = vmatprep.subr.mxu0 0.0
  %334 = vmatpush2.msra.mxu0 0.0
  %335 = vmatprep.subr.mxu0 0.0
  %336 = vmatpush2.msra.mxu0 0.0
  %337 = vmatprep.subr.mxu0 0.0
  %338 = vmatpush2.msra.mxu0 0.0
  %339 = vmatprep.subr.mxu0 0.0
  %340 = vmatpush2.msra.mxu0 0.0
  %341 = vmatprep.subr.mxu0 0.0
  %342 = vmatpush2.msra.mxu0 0.0
  %343 = vmatprep.mubr.f32.mxu0 0.0
  %344 = vmatmul.mubr.f32.gmra.mxu0 %v277
  %v345 = vpop.f32.mrf.mxu0
  %v346 = vadd.f32 %v274, %v345
  %v347 = vpop.f32.mrf.mxu0
  %348 = vdwg.mxu0
  %350 = vrot.lane.b32.xlu0 %v346, 127
  %v351 = vpop.permute.xlu0 %350
  %353 = vrot.lane.b32.xlu0 %v346, 126
  %v354 = vpop.permute.xlu0 %353
  %v356 = vld [vmem:[%s7] sm:$0xff]
  %v357 = vld [vmem:[%s8] sm:$0xff]
  %359 = vset.pattern.permute.xlu0 0
  %360 = vperm.xlu0 %359, %v357
  %v361 = vpop.permute.xlu0 %360
  %v364 = vsel %vm177, %v356, 0
  %366 = vmatprep.subr.mxu0 0.0
  %367 = vmatpush1.msra.mxu0 0.0
  %368 = vmatprep.subr.mxu0 0.0
  %369 = vmatpush1.msra.mxu0 0.0
  %370 = vmatprep.subr.mxu0 0.0
  %371 = vmatpush1.msra.mxu0 0.0
  %372 = vmatprep.subr.mxu0 0.0
  %373 = vmatpush1.msra.mxu0 0.0
  %374 = vmatprep.subr.mxu0 0.0
  %375 = vmatpush1.msra.mxu0 0.0
  %376 = vmatprep.subr.mxu0 0.0
  %377 = vmatpush1.msra.mxu0 0.0
  %378 = vmatprep.subr.mxu0 0.0
  %379 = vmatpush1.msra.mxu0 0.0
  %380 = vmatprep.subr.mxu0 0.0
  %381 = vmatpush1.msra.mxu0 0.0
  %382 = vmatprep.subr.mxu0 0.0
  %383 = vmatpush1.msra.mxu0 0.0
  %384 = vmatprep.subr.mxu0 0.0
  %385 = vmatpush1.msra.mxu0 0.0
  %386 = vmatprep.subr.mxu0 0.0
  %387 = vmatpush1.msra.mxu0 0.0
  %388 = vmatprep.subr.mxu0 0.0
  %389 = vmatpush1.msra.mxu0 0.0
  %390 = vmatprep.subr.mxu0 0.0
  %391 = vmatpush1.msra.mxu0 0.0
  %392 = vmatprep.subr.mxu0 0.0
  %393 = vmatpush1.msra.mxu0 %v354
  %394 = vmatprep.subr.mxu0 0.0
  %395 = vmatpush1.msra.mxu0 %v351
  %396 = vmatprep.subr.mxu0 0.0
  %397 = vmatpush1.msra.mxu0 %v346
  %398 = vmatprep.subr.mxu0 0.0
  %399 = vmatpush2.msra.mxu0 0.0
  %400 = vmatprep.subr.mxu0 0.0
  %401 = vmatpush2.msra.mxu0 0.0
  %402 = vmatprep.subr.mxu0 0.0
  %403 = vmatpush2.msra.mxu0 0.0
  %404 = vmatprep.subr.mxu0 0.0
  %405 = vmatpush2.msra.mxu0 0.0
  %406 = vmatprep.subr.mxu0 0.0
  %407 = vmatpush2.msra.mxu0 0.0
  %408 = vmatprep.subr.mxu0 0.0
  %409 = vmatpush2.msra.mxu0 0.0
  %410 = vmatprep.subr.mxu0 0.0
  %411 = vmatpush2.msra.mxu0 0.0
  %412 = vmatprep.subr.mxu0 0.0
  %413 = vmatpush2.msra.mxu0 0.0
  %414 = vmatprep.subr.mxu0 0.0
  %415 = vmatpush2.msra.mxu0 0.0
  %416 = vmatprep.subr.mxu0 0.0
  %417 = vmatpush2.msra.mxu0 0.0
  %418 = vmatprep.subr.mxu0 0.0
  %419 = vmatpush2.msra.mxu0 0.0
  %420 = vmatprep.subr.mxu0 0.0
  %421 = vmatpush2.msra.mxu0 0.0
  %422 = vmatprep.subr.mxu0 0.0
  %423 = vmatpush2.msra.mxu0 0.0
  %424 = vmatprep.subr.mxu0 0.0
  %425 = vmatpush2.msra.mxu0 0.0
  %426 = vmatprep.subr.mxu0 0.0
  %427 = vmatpush2.msra.mxu0 0.0
  %428 = vmatprep.subr.mxu0 0.0
  %429 = vmatpush2.msra.mxu0 0.0
  %430 = vmatprep.mubr.f32.mxu0 0.0
  %431 = vmatmul.mubr.f32.gmra.mxu0 %v364
  %v432 = vpop.f32.mrf.mxu0
  %v433 = vadd.f32 %v361, %v432
  %v434 = vpop.f32.mrf.mxu0
  %435 = vdwg.mxu0
  %v436 = vld [vmem:[%s9] sm:$0xf]
  %v437 = vld [vmem:[%s10] sm:$0xf]
  %439 = vset.pattern.permute.xlu0 0
  %440 = vperm.xlu0 %439, %v437
  %v441 = vpop.permute.xlu0 %440
  %vm443 = vcmask 64512
  %v445 = vsel %vm443, %v436, 0
  %447 = vmatprep.subr.mxu0 0.0
  %448 = vmatpush1.msra.mxu0 0.0
  %449 = vmatprep.subr.mxu0 0.0
  %450 = vmatpush1.msra.mxu0 0.0
  %451 = vmatprep.subr.mxu0 0.0
  %452 = vmatpush1.msra.mxu0 0.0
  %453 = vmatprep.subr.mxu0 0.0
  %454 = vmatpush1.msra.mxu0 0.0
  %455 = vmatprep.subr.mxu0 0.0
  %456 = vmatpush1.msra.mxu0 0.0
  %457 = vmatprep.subr.mxu0 0.0
  %458 = vmatpush1.msra.mxu0 0.0
  %459 = vmatprep.subr.mxu0 0.0
  %460 = vmatpush1.msra.mxu0 0.0
  %461 = vmatprep.subr.mxu0 0.0
  %462 = vmatpush1.msra.mxu0 0.0
  %463 = vmatprep.subr.mxu0 0.0
  %464 = vmatpush1.msra.mxu0 0.0
  %465 = vmatprep.subr.mxu0 0.0
  %466 = vmatpush1.msra.mxu0 0.0
  %467 = vmatprep.subr.mxu0 0.0
  %468 = vmatpush1.msra.mxu0 0.0
  %469 = vmatprep.subr.mxu0 0.0
  %470 = vmatpush1.msra.mxu0 0.0
  %471 = vmatprep.subr.mxu0 0.0
  %472 = vmatpush1.msra.mxu0 0.0
  %473 = vmatprep.subr.mxu0 0.0
  %474 = vmatpush1.msra.mxu0 0.0
  %475 = vmatprep.subr.mxu0 0.0
  %476 = vmatpush1.msra.mxu0 0.0
  %477 = vmatprep.subr.mxu0 0.0
  %478 = vmatpush1.msra.mxu0 %v433
  %479 = vmatprep.subr.mxu0 0.0
  %480 = vmatpush2.msra.mxu0 0.0
  %481 = vmatprep.subr.mxu0 0.0
  %482 = vmatpush2.msra.mxu0 0.0
  %483 = vmatprep.subr.mxu0 0.0
  %484 = vmatpush2.msra.mxu0 0.0
  %485 = vmatprep.subr.mxu0 0.0
  %486 = vmatpush2.msra.mxu0 0.0
  %487 = vmatprep.subr.mxu0 0.0
  %488 = vmatpush2.msra.mxu0 0.0
  %489 = vmatprep.subr.mxu0 0.0
  %490 = vmatpush2.msra.mxu0 0.0
  %491 = vmatprep.subr.mxu0 0.0
  %492 = vmatpush2.msra.mxu0 0.0
  %493 = vmatprep.subr.mxu0 0.0
  %494 = vmatpush2.msra.mxu0 0.0
  %495 = vmatprep.subr.mxu0 0.0
  %496 = vmatpush2.msra.mxu0 0.0
  %497 = vmatprep.subr.mxu0 0.0
  %498 = vmatpush2.msra.mxu0 0.0
  %499 = vmatprep.subr.mxu0 0.0
  %500 = vmatpush2.msra.mxu0 0.0
  %501 = vmatprep.subr.mxu0 0.0
  %502 = vmatpush2.msra.mxu0 0.0
  %503 = vmatprep.subr.mxu0 0.0
  %504 = vmatpush2.msra.mxu0 0.0
  %505 = vmatprep.subr.mxu0 0.0
  %506 = vmatpush2.msra.mxu0 0.0
  %507 = vmatprep.subr.mxu0 0.0
  %508 = vmatpush2.msra.mxu0 0.0
  %509 = vmatprep.subr.mxu0 0.0
  %510 = vmatpush2.msra.mxu0 0.0
  %511 = vmatprep.mubr.f32.mxu0 0.0
  %512 = vmatmul.mubr.f32.gmra.mxu0 %v445
  %v513 = vpop.f32.mrf.mxu0
  %v514 = vadd.f32 %v441, %v513
  %v515 = vpop.f32.mrf.mxu0
  %516 = vdwg.mxu0
  %v517 = vld [vmem:[%s11] sm:$0xf]
  %v518 = vld [vmem:[%s12] sm:$0xf]
  %520 = vset.pattern.permute.xlu0 0
  %521 = vperm.xlu0 %520, %v518
  %v522 = vpop.permute.xlu0 %521
  %v525 = vsel %vm443, %v517, 0
  %527 = vmatprep.subr.mxu0 0.0
  %528 = vmatpush1.msra.mxu0 0.0
  %529 = vmatprep.subr.mxu0 0.0
  %530 = vmatpush1.msra.mxu0 0.0
  %531 = vmatprep.subr.mxu0 0.0
  %532 = vmatpush1.msra.mxu0 0.0
  %533 = vmatprep.subr.mxu0 0.0
  %534 = vmatpush1.msra.mxu0 0.0
  %535 = vmatprep.subr.mxu0 0.0
  %536 = vmatpush1.msra.mxu0 0.0
  %537 = vmatprep.subr.mxu0 0.0
  %538 = vmatpush1.msra.mxu0 0.0
  %539 = vmatprep.subr.mxu0 0.0
  %540 = vmatpush1.msra.mxu0 0.0
  %541 = vmatprep.subr.mxu0 0.0
  %542 = vmatpush1.msra.mxu0 0.0
  %543 = vmatprep.subr.mxu0 0.0
  %544 = vmatpush1.msra.mxu0 0.0
  %545 = vmatprep.subr.mxu0 0.0
  %546 = vmatpush1.msra.mxu0 0.0
  %547 = vmatprep.subr.mxu0 0.0
  %548 = vmatpush1.msra.mxu0 0.0
  %549 = vmatprep.subr.mxu0 0.0
  %550 = vmatpush1.msra.mxu0 0.0
  %551 = vmatprep.subr.mxu0 0.0
  %552 = vmatpush1.msra.mxu0 0.0
  %553 = vmatprep.subr.mxu0 0.0
  %554 = vmatpush1.msra.mxu0 0.0
  %555 = vmatprep.subr.mxu0 0.0
  %556 = vmatpush1.msra.mxu0 0.0
  %557 = vmatprep.subr.mxu0 0.0
  %558 = vmatpush1.msra.mxu0 %v433
  %559 = vmatprep.subr.mxu0 0.0
  %560 = vmatpush2.msra.mxu0 0.0
  %561 = vmatprep.subr.mxu0 0.0
  %562 = vmatpush2.msra.mxu0 0.0
  %563 = vmatprep.subr.mxu0 0.0
  %564 = vmatpush2.msra.mxu0 0.0
  %565 = vmatprep.subr.mxu0 0.0
  %566 = vmatpush2.msra.mxu0 0.0
  %567 = vmatprep.subr.mxu0 0.0
  %568 = vmatpush2.msra.mxu0 0.0
  %569 = vmatprep.subr.mxu0 0.0
  %570 = vmatpush2.msra.mxu0 0.0
  %571 = vmatprep.subr.mxu0 0.0
  %572 = vmatpush2.msra.mxu0 0.0
  %573 = vmatprep.subr.mxu0 0.0
  %574 = vmatpush2.msra.mxu0 0.0
  %575 = vmatprep.subr.mxu0 0.0
  %576 = vmatpush2.msra.mxu0 0.0
  %577 = vmatprep.subr.mxu0 0.0
  %578 = vmatpush2.msra.mxu0 0.0
  %579 = vmatprep.subr.mxu0 0.0
  %580 = vmatpush2.msra.mxu0 0.0
  %581 = vmatprep.subr.mxu0 0.0
  %582 = vmatpush2.msra.mxu0 0.0
  %583 = vmatprep.subr.mxu0 0.0
  %584 = vmatpush2.msra.mxu0 0.0
  %585 = vmatprep.subr.mxu0 0.0
  %586 = vmatpush2.msra.mxu0 0.0
  %587 = vmatprep.subr.mxu0 0.0
  %588 = vmatpush2.msra.mxu0 0.0
  %589 = vmatprep.subr.mxu0 0.0
  %590 = vmatpush2.msra.mxu0 0.0
  %591 = vmatprep.mubr.f32.mxu0 0.0
  %592 = vmatmul.mubr.f32.gmra.mxu0 %v525
  %v593 = vpop.f32.mrf.mxu0
  %v594 = vadd.f32 %v522, %v593
  %v595 = vpop.f32.mrf.mxu0
  %596 = vdwg.mxu0
  %vm597 = vcmask 109568
  %598 = vst.msk [vmem:[%s14] sm:$0xf] %vm597, %v514
  %599 = vst.msk [vmem:[%s15] sm:$0xf] %vm597, %v594
  %601 = vrot.lane.b32.xlu0 %v514, 124
  %v602 = vpop.permute.xlu0 %601
  %vm604 = vcmask 224368
  %605 = vst.msk [vmem:[%s14] sm:$0xf] %vm604, %v602
  %607 = vrot.lane.b32.xlu0 %v594, 124
  %v608 = vpop.permute.xlu0 %607
  %610 = vst.msk [vmem:[%s15] sm:$0xf] %vm604, %v608
  // Predicated region
  $region58: #{conv_encoder_forward.1} parent=0 // pred_check
    _
  $region59: #{conv_encoder_forward.1} parent=0 // pred_check_branch
    %612 = sbr.rel (0) target = $region61
  $region60: #{conv_encoder_forward.1} parent=0 // pred_region
    _
  $region61: #{conv_encoder_forward.1} parent=0 // pred_fallthru
    _
  // Predicated region
  $region62: #{conv_encoder_forward.1} parent=0 // pred_check
    _
  $region63: #{conv_encoder_forward.1} parent=0 // pred_check_branch
    %614 = sbr.rel (0) target = $region65
  $region64: #{conv_encoder_forward.1} parent=0 // pred_region
    _
  $region65: #{conv_encoder_forward.1} parent=0 // pred_fallthru
    _
  // Predicated region
  $region66: #{conv_encoder_forward.1} parent=0 // pred_check
    _
  $region67: #{conv_encoder_forward.1} parent=0 // pred_check_branch
    %616 = sbr.rel (0) target = $region69
  $region68: #{conv_encoder_forward.1} parent=0 // pred_region
    _
  $region69: #{conv_encoder_forward.1} parent=0 // pred_fallthru
    _
  // Predicated region
  $region70: #{conv_encoder_forward.1} parent=0 // pred_check
    _
  $region71: #{conv_encoder_forward.1} parent=0 // pred_check_branch
    %618 = sbr.rel (0) target = $region73
  $region72: #{conv_encoder_forward.1} parent=0 // pred_region
    _
  $region73: #{conv_encoder_forward.1} parent=0 // pred_fallthru
    _

</llo_original>
